<compile_context>
chip_gen: v6e
topology: v6e:2x2x1
jax: 0.10.0
libtpu: 0.0.40
codegen_flags: <defaults>
</compile_context>

<pallas_src>
import functools

import jax
import jax.numpy as jnp
from jax import lax
from jax.experimental import pallas as pl
from jax.experimental.pallas import tpu as pltpu


def _round_up(x, m):
    return ((x + m - 1) // m) * m


def _ceil_div(a, b):
    return (a + b - 1) // b


def _k_tiling(d, tk_target):
    """Padded K, tile size tk (multiple of 128, <= tk_target), tile count."""
    kpad = _round_up(d, 128)
    nk = _ceil_div(kpad, tk_target)
    tk = 128 * _ceil_div(kpad // 128, nk)
    return tk * nk, tk, nk


def simclr_kernel(h1_ref, h2_ref, w1_ref, w2_ref, loss_ref, acc_ref,
                  *, b, temperature, bn_eps, row_block):
    k = pl.program_id(0)
    nk = pl.num_programs(0)
    n = 2 * b

    @pl.when(k == 0)
    def _init():
        acc_ref[...] = jnp.zeros_like(acc_ref)

    # First projector Linear over the current K tile.  h stays f32 in HBM; the
    # bf16 cast happens here (VPU filler under the DMA-bound loop) and
    # accumulation is f32 in VMEM scratch.  Same w1 tile serves both views.
    w1 = w1_ref[...]
    acc_ref[0:b, :] += jnp.dot(h1_ref[...].astype(w1.dtype), w1,
                               preferred_element_type=jnp.float32)
    acc_ref[b:n, :] += jnp.dot(h2_ref[...].astype(w1.dtype), w1,
                               preferred_element_type=jnp.float32)

    @pl.when(k == nk - 1)
    def _finalize():
        hpad = acc_ref.shape[1]

        # BatchNorm1d (training-mode batch stats, biased var, gamma=1/beta=0)
        # + ReLU, computed per view via a (2, B, H) reshape (statistics match
        # two independent projector passes; no concatenate copy).
        a = acc_ref[...].reshape(2, b, hpad)
        mean = jnp.mean(a, axis=1, keepdims=True)
        var = jnp.mean(jnp.square(a - mean), axis=1, keepdims=True)
        a = jnp.maximum((a - mean) * lax.rsqrt(var + bn_eps), 0.0)
        a = a.reshape(n, hpad)

        # Second projector Linear (bf16 operands, f32 accumulation).
        feats = jnp.dot(a.astype(w2_ref.dtype), w2_ref[...],
                        preferred_element_type=jnp.float32)        # (n, Opad)

        # F.normalize(dim=-1) with the similarity's 1/temperature folded into
        # the per-row scale (rsqrt on the EUP, no divides).
        sumsq = jnp.sum(feats * feats, axis=-1, keepdims=True)
        scale = lax.rsqrt(jnp.maximum(sumsq, 1e-24)) * jnp.float32(
            1.0 / temperature ** 0.5)
        fs = feats * scale                                         # (n, Opad)

        # InfoNCE (CrossEntropy(reduction='sum') over [positive, negatives],
        # then / n), streamed over row blocks of the similarity matrix:
        #   loss = (1/n) * sum_i [ logsumexp_{j != i} sim[i,j] - sim[i, i±b] ]
        neg_inf = jnp.float32(-1e30)
        loss_sum = jnp.float32(0.0)
        for r0 in range(0, n, row_block):
            rb = min(row_block, n - r0)
            f_blk = fs[r0:r0 + rb, :]                              # (rb, Opad)
            sim = lax.dot_general(f_blk, fs, (((1,), (1,)), ((), ())),
                                  preferred_element_type=jnp.float32)  # (rb,n)
            col = lax.broadcasted_iota(jnp.int32, (rb, n), 1)
            row = r0 + lax.broadcasted_iota(jnp.int32, (rb, n), 0)
            diag = col == row
            pair = (col == row + b) | (col == row - b)
            sim_m = jnp.where(diag, neg_inf, sim)
            m = jnp.max(sim_m, axis=-1, keepdims=True)
            lse = m + jnp.log(jnp.sum(jnp.exp(sim_m - m), axis=-1,
                                      keepdims=True))
            pos = jnp.sum(jnp.where(pair, sim, 0.0), axis=-1, keepdims=True)
            loss_sum = loss_sum + jnp.sum(lse - pos)

        loss_ref[0, 0] = loss_sum * jnp.float32(1.0 / n)


def prepare_weights(w1, w2, *, tk_target=1024):
    """Zero-pad projector weights to lane/tile multiples and cast to bf16.

    Hoisted out of the per-step wrapper: call once per weight update so the
    pad/cast is not re-written to HBM every invocation.  w1: (input_dim,
    hidden), w2: (hidden, out_dim).  Zero pad rows/cols are numerically inert
    through BN / ReLU / matmul / normalize.
    """
    d, hidden = w1.shape
    out_dim = w2.shape[1]
    kpad, _, _ = _k_tiling(d, tk_target)
    hpad = _round_up(hidden, 128)
    opad = _round_up(out_dim, 128)
    w1_p = jnp.zeros((kpad, hpad), jnp.bfloat16).at[:d, :hidden].set(
        w1.astype(jnp.bfloat16))
    w2_p = jnp.zeros((hpad, opad), jnp.bfloat16).at[:hidden, :out_dim].set(
        w2.astype(jnp.bfloat16))
    return w1_p, w2_p


def simclr_loss(h1, h2, w1_p, w2_p, *, temperature=0.1, bn_eps=1e-5,
                tk_target=1024, row_block=256):
    """h1, h2: (B, C, H, W) NCHW views; w1_p/w2_p from prepare_weights."""
    b = h1.shape[0]
    n = 2 * b
    h1 = h1.reshape(b, -1)                 # view(b, -1): free, no copy
    h2 = h2.reshape(b, -1)
    d = h1.shape[1]
    kpad, hpad = w1_p.shape
    opad = w2_p.shape[1]

    # K tiling: tk is a multiple of 128 that divides Kpad, close to tk_target.
    nk = _ceil_div(kpad, tk_target)
    while kpad % (128 * nk) != 0:
        nk += 1
    tk = kpad // nk

    # Pad the flattened views only if needed, in f32 (4 B/elem; no bf16 copy).
    if kpad != d:
        h1 = jnp.zeros((b, kpad), h1.dtype).at[:, :d].set(h1)
        h2 = jnp.zeros((b, kpad), h2.dtype).at[:, :d].set(h2)

    # VMEM budget: double-buffered h1/h2/w1 tiles + w2 + f32 accumulator +
    # epilogue temporaries, with headroom.  Explicit so double-buffering
    # survives v5e's 16 MiB scoped default and stays inside v7x's 64 MiB.
    rb = min(row_block, n)
    step_bytes = 2 * (2 * b * tk * 4 + tk * hpad * 2)       # h1+h2 (f32), w1
    resident = 2 * hpad * opad * 2 + n * hpad * 4           # w2, acc scratch
    epilogue = 2 * n * hpad * 4 + 2 * n * opad * 4 + 4 * rb * n * 4
    vmem_bytes = int(1.5 * (step_bytes + resident + epilogue)) + (8 << 20)
    vmem_bytes = max(min(vmem_bytes, 48 << 20), 32 << 20)

    kernel = functools.partial(
        simclr_kernel, b=b, temperature=float(temperature),
        bn_eps=float(bn_eps), row_block=rb)

    loss = pl.pallas_call(
        kernel,
        out_shape=jax.ShapeDtypeStruct((1, 1), jnp.float32),
        grid_spec=pltpu.PrefetchScalarGridSpec(
            num_scalar_prefetch=0,
            grid=(nk,),
            in_specs=[
                pl.BlockSpec((b, tk), lambda k: (0, k)),        # h1 K tile
                pl.BlockSpec((b, tk), lambda k: (0, k)),        # h2 K tile
                pl.BlockSpec((tk, hpad), lambda k: (k, 0)),     # w1 K tile
                pl.BlockSpec((hpad, opad), lambda k: (0, 0)),   # w2 resident
            ],
            out_specs=pl.BlockSpec(memory_space=pltpu.MemorySpace.SMEM),
            scratch_shapes=[pltpu.VMEM((n, hpad), jnp.float32)],
        ),
        compiler_params=pltpu.CompilerParams(
            dimension_semantics=("arbitrary",),
            vmem_limit_bytes=vmem_bytes,
        ),
    )(h1, h2, w1_p, w2_p)
    return loss[0, 0]


if __name__ == "__main__":
    # Small shapes consistent with the module: images (B, C, H, W) flattened
    # to input_dim = C*H*W, hidden_dim, out_dim=16.
    B, C, H, W = 8, 4, 8, 8
    input_dim = C * H * W          # 256
    hidden_dim = 32
    out_dim = 16
    temperature = 0.1

    key = jax.random.PRNGKey(0)
    k1, k2, kw1, kw2 = jax.random.split(key, 4)

    h1 = jax.random.normal(k1, (B, C, H, W), dtype=jnp.float32)
    h2 = jax.random.normal(k2, (B, C, H, W), dtype=jnp.float32)

    # PyTorch-style Linear(bias=False) init: U(-1/sqrt(fan_in), 1/sqrt(fan_in)),
    # stored as (in_features, out_features) so the kernel computes x @ W.
    bound1 = 1.0 / float(input_dim) ** 0.5
    bound2 = 1.0 / float(hidden_dim) ** 0.5
    w1 = jax.random.uniform(kw1, (input_dim, hidden_dim),
                            minval=-bound1, maxval=bound1, dtype=jnp.float32)
    w2 = jax.random.uniform(kw2, (hidden_dim, out_dim),
                            minval=-bound2, maxval=bound2, dtype=jnp.float32)

    # Weight pad + bf16 cast done once, outside the step.
    w1_p, w2_p = prepare_weights(w1, w2)

    loss_fn = jax.jit(functools.partial(simclr_loss, temperature=temperature))
    loss = loss_fn(h1, h2, w1_p, w2_p)
    jax.block_until_ready(loss)
    assert bool(jnp.isfinite(loss))
    print("KERNEL_OK")
</pallas_src>

<mosaic_0001>
module attributes {stable_mosaic.version = 11 : i64} {
  func.func @simclr_kernel(%arg0: i32, %arg1: memref<8x256xf32, #tpu.memory_space<vmem>>, %arg2: memref<8x256xf32, #tpu.memory_space<vmem>>, %arg3: memref<256x128xbf16, #tpu.memory_space<vmem>>, %arg4: memref<128x128xbf16, #tpu.memory_space<vmem>>, %arg5: memref<1x1xf32, #tpu.memory_space<smem>>, %arg6: memref<16x128xf32, #tpu.memory_space<vmem>>) attributes {dimension_semantics = [#tpu.dimension_semantics<arbitrary>], iteration_bounds = array<i64: 1>, scalar_prefetch = 0 : i64, scratch_operands = 1 : i64, tpu.core_type = #tpu.core_type<tc>, window_params = [{transform_indices = @transform_0, window_bounds = array<i64: 8, 256>}, {transform_indices = @transform_1, window_bounds = array<i64: 8, 256>}, {transform_indices = @transform_2, window_bounds = array<i64: 256, 128>}, {pipeline_mode = #tpu.pipeline_mode<synchronous>, transform_indices = @transform_3, window_bounds = array<i64: 128, 128>}, {transform_indices = @transform_4, window_bounds = array<i64: 1, 1>}]} {
    %c0_i32 = arith.constant 0 : i32
    %0 = arith.cmpi eq, %arg0, %c0_i32 : i32
    %1 = arith.extui %0 : i1 to i32
    %c0_i32_0 = arith.constant 0 : i32
    %2 = arith.cmpi ne, %1, %c0_i32_0 : i32
    scf.if %2 {
      %cst_16 = arith.constant 0.000000e+00 : f32
      %19 = vector.broadcast %cst_16 : f32 to vector<16x128xf32>
      %c0_17 = arith.constant 0 : index
      %c0_18 = arith.constant 0 : index
      %20 = vector.load %arg6[%c0_17, %c0_18] : memref<16x128xf32, #tpu.memory_space<vmem>>, vector<16x128xf32>
      tpu.vector_store %arg6[%c0_17, %c0_18], %19 {strides = array<i32>} : memref<16x128xf32, #tpu.memory_space<vmem>>, vector<16x128xf32>,
    } else {
    }
    %c0 = arith.constant 0 : index
    %c0_1 = arith.constant 0 : index
    %3 = vector.load %arg3[%c0, %c0_1] : memref<256x128xbf16, #tpu.memory_space<vmem>>, vector<256x128xbf16>
    %c0_2 = arith.constant 0 : index
    %c0_3 = arith.constant 0 : index
    %4 = vector.load %arg6[%c0_2, %c0_3] : memref<16x128xf32, #tpu.memory_space<vmem>>, vector<8x128xf32>
    %c0_4 = arith.constant 0 : index
    %c0_5 = arith.constant 0 : index
    %5 = vector.load %arg1[%c0_4, %c0_5] : memref<8x256xf32, #tpu.memory_space<vmem>>, vector<8x256xf32>
    %6 = arith.truncf %5 : vector<8x256xf32> to vector<8x256xbf16>
    %cst = arith.constant dense<0.000000e+00> : vector<8x128xf32>
    %7 = tpu.matmul %6, %3, %cst {dimension_numbers = #tpu.dot_dimension_numbers<[1], [0], [0], [1], [0, 0, 1, 1], [], []>} : vector<8x256xbf16>, vector<256x128xbf16>, vector<8x128xf32> -> vector<8x128xf32>
    %8 = arith.addf %4, %7 : vector<8x128xf32>
    %c0_6 = arith.constant 0 : index
    %c0_7 = arith.constant 0 : index
    %9 = vector.load %arg6[%c0_6, %c0_7] : memref<16x128xf32, #tpu.memory_space<vmem>>, vector<8x128xf32>
    tpu.vector_store %arg6[%c0_6, %c0_7], %8 {strides = array<i32>} : memref<16x128xf32, #tpu.memory_space<vmem>>, vector<8x128xf32>,
    %c8 = arith.constant 8 : index
    %c0_8 = arith.constant 0 : index
    %10 = vector.load %arg6[%c8, %c0_8] : memref<16x128xf32, #tpu.memory_space<vmem>>, vector<8x128xf32>
    %c0_9 = arith.constant 0 : index
    %c0_10 = arith.constant 0 : index
    %11 = vector.load %arg2[%c0_9, %c0_10] : memref<8x256xf32, #tpu.memory_space<vmem>>, vector<8x256xf32>
    %12 = arith.truncf %11 : vector<8x256xf32> to vector<8x256xbf16>
    %cst_11 = arith.constant dense<0.000000e+00> : vector<8x128xf32>
    %13 = tpu.matmul %12, %3, %cst_11 {dimension_numbers = #tpu.dot_dimension_numbers<[1], [0], [0], [1], [0, 0, 1, 1], [], []>} : vector<8x256xbf16>, vector<256x128xbf16>, vector<8x128xf32> -> vector<8x128xf32>
    %14 = arith.addf %10, %13 : vector<8x128xf32>
    %c8_12 = arith.constant 8 : index
    %c0_13 = arith.constant 0 : index
    %15 = vector.load %arg6[%c8_12, %c0_13] : memref<16x128xf32, #tpu.memory_space<vmem>>, vector<8x128xf32>
    tpu.vector_store %arg6[%c8_12, %c0_13], %14 {strides = array<i32>} : memref<16x128xf32, #tpu.memory_space<vmem>>, vector<8x128xf32>,
    %c0_i32_14 = arith.constant 0 : i32
    %16 = arith.cmpi eq, %arg0, %c0_i32_14 : i32
    %17 = arith.extui %16 : i1 to i32
    %c0_i32_15 = arith.constant 0 : i32
    %18 = arith.cmpi ne, %17, %c0_i32_15 : i32
    scf.if %18 {
      %c0_16 = arith.constant 0 : index
      %c0_17 = arith.constant 0 : index
      %19 = vector.load %arg6[%c0_16, %c0_17] : memref<16x128xf32, #tpu.memory_space<vmem>>, vector<16x128xf32>
      %20 = vector.shape_cast %19 : vector<16x128xf32> to vector<2x8x128xf32>
      %cst_18 = arith.constant dense<0.000000e+00> : vector<2x128xf32>
      %21 = vector.multi_reduction <add>, %20, %cst_18 [1] : vector<2x8x128xf32> to vector<2x128xf32>
      %22 = vector.shape_cast %21 : vector<2x128xf32> to vector<2x1x128xf32>
      %cst_19 = arith.constant 8.000000e+00 : f32
      %23 = vector.broadcast %cst_19 : f32 to vector<2x1x128xf32>
      %24 = arith.divf %22, %23 : vector<2x1x128xf32>
      %25 = vector.broadcast %24 : vector<2x1x128xf32> to vector<2x8x128xf32>
      %26 = arith.subf %20, %25 : vector<2x8x128xf32>
      %27 = arith.mulf %26, %26 : vector<2x8x128xf32>
      %cst_20 = arith.constant dense<0.000000e+00> : vector<2x128xf32>
      %28 = vector.multi_reduction <add>, %27, %cst_20 [1] : vector<2x8x128xf32> to vector<2x128xf32>
      %29 = vector.shape_cast %28 : vector<2x128xf32> to vector<2x1x128xf32>
      %cst_21 = arith.constant 8.000000e+00 : f32
      %30 = vector.broadcast %cst_21 : f32 to vector<2x1x128xf32>
      %31 = arith.divf %29, %30 : vector<2x1x128xf32>
      %32 = vector.broadcast %24 : vector<2x1x128xf32> to vector<2x8x128xf32>
      %33 = arith.subf %20, %32 : vector<2x8x128xf32>
      %cst_22 = arith.constant 9.99999974E-6 : f32
      %34 = vector.broadcast %cst_22 : f32 to vector<2x1x128xf32>
      %35 = arith.addf %31, %34 : vector<2x1x128xf32>
      %36 = math.rsqrt %35 : vector<2x1x128xf32>
      %37 = vector.broadcast %36 : vector<2x1x128xf32> to vector<2x8x128xf32>
      %38 = arith.mulf %33, %37 : vector<2x8x128xf32>
      %cst_23 = arith.constant 0.000000e+00 : f32
      %39 = vector.broadcast %cst_23 : f32 to vector<2x8x128xf32>
      %40 = arith.maximumf %38, %39 : vector<2x8x128xf32>
      %41 = vector.shape_cast %40 : vector<2x8x128xf32> to vector<16x128xf32>
      %42 = arith.truncf %41 : vector<16x128xf32> to vector<16x128xbf16>
      %c0_24 = arith.constant 0 : index
      %c0_25 = arith.constant 0 : index
      %43 = vector.load %arg4[%c0_24, %c0_25] : memref<128x128xbf16, #tpu.memory_space<vmem>>, vector<128x128xbf16>
      %cst_26 = arith.constant dense<0.000000e+00> : vector<16x128xf32>
      %44 = tpu.matmul %42, %43, %cst_26 {dimension_numbers = #tpu.dot_dimension_numbers<[1], [0], [0], [1], [0, 0, 1, 1], [], []>} : vector<16x128xbf16>, vector<128x128xbf16>, vector<16x128xf32> -> vector<16x128xf32>
      %45 = arith.mulf %44, %44 : vector<16x128xf32>
      %cst_27 = arith.constant dense<0.000000e+00> : vector<16xf32>
      %46 = vector.multi_reduction <add>, %45, %cst_27 [1] : vector<16x128xf32> to vector<16xf32>
      %47 = vector.shape_cast %46 : vector<16xf32> to vector<16x1xf32>
      %cst_28 = arith.constant 1.000000e-24 : f32
      %48 = vector.broadcast %cst_28 : f32 to vector<16x1xf32>
      %49 = arith.maximumf %47, %48 : vector<16x1xf32>
      %50 = math.rsqrt %49 : vector<16x1xf32>
      %cst_29 = arith.constant 3.1622777 : f32
      %51 = vector.broadcast %cst_29 : f32 to vector<16x1xf32>
      %52 = arith.mulf %50, %51 : vector<16x1xf32>
      %53 = vector.broadcast %52 : vector<16x1xf32> to vector<16x128xf32>
      %54 = arith.mulf %44, %53 : vector<16x128xf32>
      %cst_30 = arith.constant dense<0.000000e+00> : vector<16x16xf32>
      %55 = tpu.matmul %54, %54, %cst_30 {dimension_numbers = #tpu.dot_dimension_numbers<[1], [1], [0], [0], [0, 0, 1, 0], [], []>} : vector<16x128xf32>, vector<16x128xf32>, vector<16x16xf32> -> vector<16x16xf32>
      %56 = tpu.iota {dimensions = array<i32: 1>} : vector<16x16xi32>
      %57 = tpu.iota {dimensions = array<i32: 0>} : vector<16x16xi32>
      %c0_i32_31 = arith.constant 0 : i32
      %58 = vector.broadcast %c0_i32_31 : i32 to vector<16x16xi32>
      %59 = arith.addi %58, %57 : vector<16x16xi32>
      %60 = arith.cmpi eq, %56, %59 : vector<16x16xi32>
      %c8_i32 = arith.constant 8 : i32
      %61 = vector.broadcast %c8_i32 : i32 to vector<16x16xi32>
      %62 = arith.addi %59, %61 : vector<16x16xi32>
      %63 = arith.cmpi eq, %56, %62 : vector<16x16xi32>
      %c8_i32_32 = arith.constant 8 : i32
      %64 = vector.broadcast %c8_i32_32 : i32 to vector<16x16xi32>
      %65 = arith.subi %59, %64 : vector<16x16xi32>
      %66 = arith.cmpi eq, %56, %65 : vector<16x16xi32>
      %67 = arith.ori %63, %66 : vector<16x16xi1>
      %cst_33 = arith.constant -1.000000e+30 : f32
      %68 = vector.broadcast %cst_33 : f32 to vector<16x16xf32>
      %69 = arith.select %60, %68, %55 : vector<16x16xi1>, vector<16x16xf32>
      %cst_34 = arith.constant dense<0xFF800000> : vector<16xf32>
      %70 = vector.multi_reduction <maximumf>, %69, %cst_34 [1] : vector<16x16xf32> to vector<16xf32>
      %71 = vector.shape_cast %70 : vector<16xf32> to vector<16x1xf32>
      %72 = vector.broadcast %71 : vector<16x1xf32> to vector<16x16xf32>
      %73 = arith.subf %69, %72 : vector<16x16xf32>
      %74 = math.exp %73 : vector<16x16xf32>
      %cst_35 = arith.constant dense<0.000000e+00> : vector<16xf32>
      %75 = vector.multi_reduction <add>, %74, %cst_35 [1] : vector<16x16xf32> to vector<16xf32>
      %76 = vector.shape_cast %75 : vector<16xf32> to vector<16x1xf32>
      %77 = math.log %76 : vector<16x1xf32>
      %78 = arith.addf %71, %77 : vector<16x1xf32>
      %cst_36 = arith.constant 0.000000e+00 : f32
      %79 = vector.broadcast %cst_36 : f32 to vector<16x16xf32>
      %80 = arith.select %67, %55, %79 : vector<16x16xi1>, vector<16x16xf32>
      %cst_37 = arith.constant dense<0.000000e+00> : vector<16xf32>
      %81 = vector.multi_reduction <add>, %80, %cst_37 [1] : vector<16x16xf32> to vector<16xf32>
      %82 = vector.shape_cast %81 : vector<16xf32> to vector<16x1xf32>
      %83 = arith.subf %78, %82 : vector<16x1xf32>
      %84 = vector.shape_cast %83 : vector<16x1xf32> to vector<1x16x1xf32>
      %cst_38 = arith.constant dense<0.000000e+00> : vector<1xf32>
      %85 = vector.multi_reduction <add>, %84, %cst_38 [1, 2] : vector<1x16x1xf32> to vector<1xf32>
      %86 = vector.shape_cast %85 : vector<1xf32> to vector<1x1x1xf32>
      %87 = vector.extract %86[0, 0, 0] : f32 from vector<1x1x1xf32>
      %cst_39 = arith.constant 0.000000e+00 : f32
      %88 = arith.addf %cst_39, %87 : f32
      %cst_40 = arith.constant 6.250000e-02 : f32
      %89 = arith.mulf %88, %cst_40 : f32
      %c0_41 = arith.constant 0 : index
      %c0_42 = arith.constant 0 : index
      %90 = memref.load %arg5[%c0_41, %c0_42] : memref<1x1xf32, #tpu.memory_space<smem>>
      memref.store %89, %arg5[%c0_41, %c0_42] : memref<1x1xf32, #tpu.memory_space<smem>>
    } else {
    }
    return
  }
  func.func @transform_0(%arg0: i32) -> (i32, i32) {
    %c0_i32 = arith.constant 0 : i32
    %c0_i32_0 = arith.constant 0 : i32
    return %c0_i32, %arg0 : i32, i32
  }
  func.func @transform_1(%arg0: i32) -> (i32, i32) {
    %c0_i32 = arith.constant 0 : i32
    %c0_i32_0 = arith.constant 0 : i32
    return %c0_i32, %arg0 : i32, i32
  }
  func.func @transform_2(%arg0: i32) -> (i32, i32) {
    %c0_i32 = arith.constant 0 : i32
    %c0_i32_0 = arith.constant 0 : i32
    return %arg0, %c0_i32 : i32, i32
  }
  func.func @transform_3(%arg0: i32) -> (i32, i32) {
    %c0_i32 = arith.constant 0 : i32
    %c0_i32_0 = arith.constant 0 : i32
    %c0_i32_1 = arith.constant 0 : i32
    return %c0_i32, %c0_i32_0 : i32, i32
  }
  func.func @transform_4(%arg0: i32) -> (i32, i32) {
    %c0_i32 = arith.constant 0 : i32
    %c0_i32_0 = arith.constant 0 : i32
    %c0_i32_1 = arith.constant 0 : i32
    return %c0_i32, %c0_i32_0 : i32, i32
  }
}

</mosaic_0001>

<llo_original>
// kernel: simclr_loss.1
$region0: #{simclr_loss.1}
  #allocation0 [shape = 'u32[]', space=smem, size = 0x4, offset = 0x4, fixed_abs, tag = 'smem constant byte address 0x4 - core index']
  #allocation1 [shape = 'u32[144,128]{1,0:T(1,128)}', space=vmem, size = 0x12000, scoped, tag = 'internal scratch']
  #allocation2 [shape = 'f32[16,128]{1,0:T(8,128)}', space=vmem, size = 0x2000, scoped, tag = 'scratch operand']
  %s0 = inlined_call_operand.vmem [shape: f32[8,256], index: 0, kind: input, shape index: {}]
  %s1 = inlined_call_operand.vmem [shape: f32[8,256], index: 1, kind: input, shape index: {}]
  %s2 = inlined_call_operand.vmem [shape: bf16[256,128], index: 2, kind: input, shape index: {}]
  %s3 = inlined_call_operand.vmem [shape: bf16[128,128], index: 3, kind: input, shape index: {}]
  %s4 = inlined_call_operand.hbm [shape: f32[1,1], index: 4, kind: output, shape index: {}]
  %s5 = sld [smem:[#allocation0]]
  $region34: #{simclr_loss.1} parent=0
    _
  %s7 = ssub.s32 1, %s5
  %s8 = scalar_select 0, %s7, %s5
  $region1: #{simclr_loss.1} parent=0
    #allocation3 [shape = 'u8[512]{0}', space=smem, size = 0x200, scoped, tag = 'output window, operand 0, single buffered']
    #allocation4 [shape = 's32[1]{0}', space=sflag, size = 0x4, scoped, tag = 'scoped memory for simclr_loss.1']
    %9 = vsyncpa [#allocation4], 0
    // Predicated region
    $region2: #{simclr_loss.1} parent=1 // pred_check
      _
    $region3: #{simclr_loss.1} parent=1 // pred_check_branch
      %11 = sbr.rel (0) target = $region5
    $region4: #{simclr_loss.1} parent=1 // pred_region
      _
    $region5: #{simclr_loss.1} parent=1 // pred_fallthru
      _
    // Predicated region
    $region6: #{simclr_loss.1} parent=1 // pred_check
      _
    $region7: #{simclr_loss.1} parent=1 // pred_check_branch
      %13 = sbr.rel (0) target = $region9
    $region8: #{simclr_loss.1} parent=1 // pred_region
      _
    $region9: #{simclr_loss.1} parent=1 // pred_fallthru
      _
    // Predicated region
    $region10: #{simclr_loss.1} parent=1 // pred_check
      _
    $region11: #{simclr_loss.1} parent=1 // pred_check_branch
      %15 = sbr.rel (0) target = $region13
    $region12: #{simclr_loss.1} parent=1 // pred_region
      _
    $region13: #{simclr_loss.1} parent=1 // pred_fallthru
      _
    // Predicated region
    $region14: #{simclr_loss.1} parent=1 // pred_check
      _
    $region15: #{simclr_loss.1} parent=1 // pred_check_branch
      %17 = sbr.rel (0) target = $region17
    $region16: #{simclr_loss.1} parent=1 // pred_region
      _
    $region17: #{simclr_loss.1} parent=1 // pred_fallthru
      _
    %p19 = scmp.eq.s32.totalorder 0, 0
    // Predicated region
    $region18: #{simclr_loss.1} parent=1 // pred_check
      %p20 = pneg %p19
    $region19: #{simclr_loss.1} parent=1 // pred_check_branch
      %22 = sbr.rel (%p20) target = $region21
    $region20: #{simclr_loss.1} parent=1 // pred_region
      %23 = vst [vmem:[#allocation2] sm:$0xff] 0.0
      %24 = vst [vmem:[#allocation2 + $0x8] sm:$0xff] 0.0
    $region21: #{simclr_loss.1} parent=1 // pred_fallthru
      _
    %v25 = vld [vmem:[%s2] sm:$0xf]
    %v26 = vld [vmem:[%s2 + $0x4] sm:$0xf]
    %v27 = vld [vmem:[%s2 + $0x8] sm:$0xf]
    %v28 = vld [vmem:[%s2 + $0xc] sm:$0xf]
    %v29 = vld [vmem:[%s2 + $0x10] sm:$0xf]
    %v30 = vld [vmem:[%s2 + $0x14] sm:$0xf]
    %v31 = vld [vmem:[%s2 + $0x18] sm:$0xf]
    %v32 = vld [vmem:[%s2 + $0x1c] sm:$0xf]
    %v33 = vld [vmem:[%s2 + $0x20] sm:$0xf]
    %v34 = vld [vmem:[%s2 + $0x24] sm:$0xf]
    %v35 = vld [vmem:[%s2 + $0x28] sm:$0xf]
    %v36 = vld [vmem:[%s2 + $0x2c] sm:$0xf]
    %v37 = vld [vmem:[%s2 + $0x30] sm:$0xf]
    %v38 = vld [vmem:[%s2 + $0x34] sm:$0xf]
    %v39 = vld [vmem:[%s2 + $0x38] sm:$0xf]
    %v40 = vld [vmem:[%s2 + $0x3c] sm:$0xf]
    %v41 = vld [vmem:[%s2 + $0x40] sm:$0xf]
    %v42 = vld [vmem:[%s2 + $0x44] sm:$0xf]
    %v43 = vld [vmem:[%s2 + $0x48] sm:$0xf]
    %v44 = vld [vmem:[%s2 + $0x4c] sm:$0xf]
    %v45 = vld [vmem:[%s2 + $0x50] sm:$0xf]
    %v46 = vld [vmem:[%s2 + $0x54] sm:$0xf]
    %v47 = vld [vmem:[%s2 + $0x58] sm:$0xf]
    %v48 = vld [vmem:[%s2 + $0x5c] sm:$0xf]
    %v49 = vld [vmem:[%s2 + $0x60] sm:$0xf]
    %v50 = vld [vmem:[%s2 + $0x64] sm:$0xf]
    %v51 = vld [vmem:[%s2 + $0x68] sm:$0xf]
    %v52 = vld [vmem:[%s2 + $0x6c] sm:$0xf]
    %v53 = vld [vmem:[%s2 + $0x70] sm:$0xf]
    %v54 = vld [vmem:[%s2 + $0x74] sm:$0xf]
    %v55 = vld [vmem:[%s2 + $0x78] sm:$0xf]
    %v56 = vld [vmem:[%s2 + $0x7c] sm:$0xf]
    %v57 = vld [vmem:[#allocation2] sm:$0xff]
    %v58 = vld [vmem:[%s0] sm:$0xff]
    %v59 = vld [vmem:[%s0 + $0x8] sm:$0xff]
    %v60 = vpack.c.bf16 %v58, %v58
    %v61 = vpack.c.bf16 %v59, %v59
    %v94 = vunpack.c.l.b16 %v25
    %v95 = vunpack.c.l.b16 %v26
    %v96 = vunpack.c.l.b16 %v27
    %v97 = vunpack.c.l.b16 %v28
    %v98 = vunpack.c.l.b16 %v29
    %v99 = vunpack.c.l.b16 %v30
    %v100 = vunpack.c.l.b16 %v31
    %v101 = vunpack.c.l.b16 %v32
    %v102 = vunpack.c.l.b16 %v33
    %v103 = vunpack.c.l.b16 %v34
    %v104 = vunpack.c.l.b16 %v35
    %v105 = vunpack.c.l.b16 %v36
    %v106 = vunpack.c.l.b16 %v37
    %v107 = vunpack.c.l.b16 %v38
    %v108 = vunpack.c.l.b16 %v39
    %v109 = vunpack.c.l.b16 %v40
    %v110 = vunpack.c.l.b16 %v41
    %v111 = vunpack.c.l.b16 %v42
    %v112 = vunpack.c.l.b16 %v43
    %v113 = vunpack.c.l.b16 %v44
    %v114 = vunpack.c.l.b16 %v45
    %v115 = vunpack.c.l.b16 %v46
    %v116 = vunpack.c.l.b16 %v47
    %v117 = vunpack.c.l.b16 %v48
    %v118 = vunpack.c.l.b16 %v49
    %v119 = vunpack.c.l.b16 %v50
    %v120 = vunpack.c.l.b16 %v51
    %v121 = vunpack.c.l.b16 %v52
    %v122 = vunpack.c.l.b16 %v53
    %v123 = vunpack.c.l.b16 %v54
    %v124 = vunpack.c.l.b16 %v55
    %v125 = vunpack.c.l.b16 %v56
    %v126 = vpack.c.b16 %v95, %v94
    %v127 = vpack.c.b16 %v97, %v96
    %v128 = vpack.c.b16 %v99, %v98
    %v129 = vpack.c.b16 %v101, %v100
    %v130 = vpack.c.b16 %v103, %v102
    %v131 = vpack.c.b16 %v105, %v104
    %v132 = vpack.c.b16 %v107, %v106
    %v133 = vpack.c.b16 %v109, %v108
    %v134 = vpack.c.b16 %v111, %v110
    %v135 = vpack.c.b16 %v113, %v112
    %v136 = vpack.c.b16 %v115, %v114
    %v137 = vpack.c.b16 %v117, %v116
    %v138 = vpack.c.b16 %v119, %v118
    %v139 = vpack.c.b16 %v121, %v120
    %v140 = vpack.c.b16 %v123, %v122
    %v141 = vpack.c.b16 %v125, %v124
    %158 = vmatprep.subr.bf16.mxu0 0
    %159 = vmatpush1.bf16.msra.mxu0 %v133
    %160 = vmatprep.subr.bf16.mxu0 0
    %161 = vmatpush1.bf16.msra.mxu0 %v132
    %162 = vmatprep.subr.bf16.mxu0 0
    %163 = vmatpush1.bf16.msra.mxu0 %v131
    %164 = vmatprep.subr.bf16.mxu0 0
    %165 = vmatpush1.bf16.msra.mxu0 %v130
    %166 = vmatprep.subr.bf16.mxu0 0
    %167 = vmatpush1.bf16.msra.mxu0 %v129
    %168 = vmatprep.subr.bf16.mxu0 0
    %169 = vmatpush1.bf16.msra.mxu0 %v128
    %170 = vmatprep.subr.bf16.mxu0 0
    %171 = vmatpush1.bf16.msra.mxu0 %v127
    %172 = vmatprep.subr.bf16.mxu0 0
    %173 = vmatpush1.bf16.msra.mxu0 %v126
    %174 = vmatprep.subr.bf16.mxu0 0
    %175 = vmatpush2.bf16.msra.mxu0 %v141
    %176 = vmatprep.subr.bf16.mxu0 0
    %177 = vmatpush2.bf16.msra.mxu0 %v140
    %178 = vmatprep.subr.bf16.mxu0 0
    %179 = vmatpush2.bf16.msra.mxu0 %v139
    %180 = vmatprep.subr.bf16.mxu0 0
    %181 = vmatpush2.bf16.msra.mxu0 %v138
    %182 = vmatprep.subr.bf16.mxu0 0
    %183 = vmatpush2.bf16.msra.mxu0 %v137
    %184 = vmatprep.subr.bf16.mxu0 0
    %185 = vmatpush2.bf16.msra.mxu0 %v136
    %186 = vmatprep.subr.bf16.mxu0 0
    %187 = vmatpush2.bf16.msra.mxu0 %v135
    %188 = vmatprep.subr.bf16.mxu0 0
    %189 = vmatpush2.bf16.msra.mxu0 %v134
    %190 = vmatprep.mubr.bf16.mxu0 %v61
    %191 = vmatmul.mubr.bf16.gmra.mxu0 %v60
    %v192 = vpop.f32.mrf.mxu0
    %v193 = vadd.f32 0.0, %v192
    %v194 = vpop.f32.mrf.mxu0
    %v195 = vpop.f32.mrf.mxu0
    %v196 = vpop.f32.mrf.mxu0
    %197 = vdwg.mxu0
    %v198 = vadd.f32 %v57, %v193
    %199 = vst [vmem:[#allocation2] sm:$0xff] %v198
    %v200 = vld [vmem:[#allocation2 + $0x8] sm:$0xff]
    %v201 = vld [vmem:[%s1] sm:$0xff]
    %v202 = vld [vmem:[%s1 + $0x8] sm:$0xff]
    %v203 = vpack.c.bf16 %v201, %v201
    %v204 = vpack.c.bf16 %v202, %v202
    %205 = vmatprep.subr.bf16.mxu0 0
    %206 = vmatpush1.bf16.msra.mxu0 %v133
    %207 = vmatprep.subr.bf16.mxu0 0
    %208 = vmatpush1.bf16.msra.mxu0 %v132
    %209 = vmatprep.subr.bf16.mxu0 0
    %210 = vmatpush1.bf16.msra.mxu0 %v131
    %211 = vmatprep.subr.bf16.mxu0 0
    %212 = vmatpush1.bf16.msra.mxu0 %v130
    %213 = vmatprep.subr.bf16.mxu0 0
    %214 = vmatpush1.bf16.msra.mxu0 %v129
    %215 = vmatprep.subr.bf16.mxu0 0
    %216 = vmatpush1.bf16.msra.mxu0 %v128
    %217 = vmatprep.subr.bf16.mxu0 0
    %218 = vmatpush1.bf16.msra.mxu0 %v127
    %219 = vmatprep.subr.bf16.mxu0 0
    %220 = vmatpush1.bf16.msra.mxu0 %v126
    %221 = vmatprep.subr.bf16.mxu0 0
    %222 = vmatpush2.bf16.msra.mxu0 %v141
    %223 = vmatprep.subr.bf16.mxu0 0
    %224 = vmatpush2.bf16.msra.mxu0 %v140
    %225 = vmatprep.subr.bf16.mxu0 0
    %226 = vmatpush2.bf16.msra.mxu0 %v139
    %227 = vmatprep.subr.bf16.mxu0 0
    %228 = vmatpush2.bf16.msra.mxu0 %v138
    %229 = vmatprep.subr.bf16.mxu0 0
    %230 = vmatpush2.bf16.msra.mxu0 %v137
    %231 = vmatprep.subr.bf16.mxu0 0
    %232 = vmatpush2.bf16.msra.mxu0 %v136
    %233 = vmatprep.subr.bf16.mxu0 0
    %234 = vmatpush2.bf16.msra.mxu0 %v135
    %235 = vmatprep.subr.bf16.mxu0 0
    %236 = vmatpush2.bf16.msra.mxu0 %v134
    %237 = vmatprep.mubr.bf16.mxu0 %v204
    %238 = vmatmul.mubr.bf16.gmra.mxu0 %v203
    %v239 = vpop.f32.mrf.mxu0
    %v240 = vadd.f32 0.0, %v239
    %v241 = vpop.f32.mrf.mxu0
    %v242 = vpop.f32.mrf.mxu0
    %v243 = vpop.f32.mrf.mxu0
    %244 = vdwg.mxu0
    %v245 = vadd.f32 %v200, %v240
    %246 = vst [vmem:[#allocation2 + $0x8] sm:$0xff] %v245
    // Predicated region
    $region22: #{simclr_loss.1} parent=1 // pred_check
      %p247 = pneg %p19
    $region23: #{simclr_loss.1} parent=1 // pred_check_branch
      %249 = sbr.rel (%p247) target = $region25
    $region24: #{simclr_loss.1} parent=1 // pred_region
      %v250 = vld [vmem:[#allocation2] sm:$0xff]
      %v251 = vld [vmem:[#allocation2 + $0x8] sm:$0xff]
      %v252 = vrot.slane %v250, 4
      %v253 = vadd.f32 %v250, %v252
      %v254 = vrot.slane %v253, 2
      %v255 = vadd.f32 %v253, %v254
      %v256 = vrot.slane %v255, 1
      %v257 = vadd.f32 %v255, %v256
      %v258 = vrot.slane %v251, 4
      %v259 = vadd.f32 %v251, %v258
      %v260 = vrot.slane %v259, 2
      %v261 = vadd.f32 %v259, %v260
      %v262 = vrot.slane %v261, 1
      %v263 = vadd.f32 %v261, %v262
      %v264 = vrcp.pop 8.0
      %v265 = vmul.f32 %v257, %v264
      %v266 = vmul.f32 %v263, %v264
      %v267 = vsub.f32 %v250, %v265
      %v268 = vsub.f32 %v251, %v266
      %v269 = vmul.f32 %v267, %v267
      %v270 = vmul.f32 %v268, %v268
      %v271 = vrot.slane %v269, 4
      %v272 = vadd.f32 %v269, %v271
      %v273 = vrot.slane %v272, 2
      %v274 = vadd.f32 %v272, %v273
      %v275 = vrot.slane %v274, 1
      %v276 = vadd.f32 %v274, %v275
      %v277 = vrot.slane %v270, 4
      %v278 = vadd.f32 %v270, %v277
      %v279 = vrot.slane %v278, 2
      %v280 = vadd.f32 %v278, %v279
      %v281 = vrot.slane %v280, 1
      %v282 = vadd.f32 %v280, %v281
      %v283 = vmul.f32 %v276, %v264
      %v284 = vmul.f32 %v282, %v264
      %v285 = vadd.f32 %v283, 1e-05
      %v286 = vadd.f32 %v284, 1e-05
      %v287 = vrsqrt.pop %v285
      %v288 = vrsqrt.pop %v286
      %v289 = vmul.f32 %v267, %v287
      %v290 = vmul.f32 %v268, %v288
      %v291 = vmax.f32 %v289, 0.0
      %v292 = vmax.f32 %v290, 0.0
      %v293 = vpack.c.bf16 %v292, %v291
      %v294 = vld [vmem:[%s3] sm:$0xf]
      %v295 = vld [vmem:[%s3 + $0x4] sm:$0xf]
      %v296 = vld [vmem:[%s3 + $0x8] sm:$0xf]
      %v297 = vld [vmem:[%s3 + $0xc] sm:$0xf]
      %v298 = vld [vmem:[%s3 + $0x10] sm:$0xf]
      %v299 = vld [vmem:[%s3 + $0x14] sm:$0xf]
      %v300 = vld [vmem:[%s3 + $0x18] sm:$0xf]
      %v301 = vld [vmem:[%s3 + $0x1c] sm:$0xf]
      %v302 = vld [vmem:[%s3 + $0x20] sm:$0xf]
      %v303 = vld [vmem:[%s3 + $0x24] sm:$0xf]
      %v304 = vld [vmem:[%s3 + $0x28] sm:$0xf]
      %v305 = vld [vmem:[%s3 + $0x2c] sm:$0xf]
      %v306 = vld [vmem:[%s3 + $0x30] sm:$0xf]
      %v307 = vld [vmem:[%s3 + $0x34] sm:$0xf]
      %v308 = vld [vmem:[%s3 + $0x38] sm:$0xf]
      %v309 = vld [vmem:[%s3 + $0x3c] sm:$0xf]
      %v326 = vunpack.c.l.b16 %v294
      %v327 = vunpack.c.l.b16 %v295
      %v328 = vunpack.c.l.b16 %v296
      %v329 = vunpack.c.l.b16 %v297
      %v330 = vunpack.c.l.b16 %v298
      %v331 = vunpack.c.l.b16 %v299
      %v332 = vunpack.c.l.b16 %v300
      %v333 = vunpack.c.l.b16 %v301
      %v334 = vunpack.c.l.b16 %v302
      %v335 = vunpack.c.l.b16 %v303
      %v336 = vunpack.c.l.b16 %v304
      %v337 = vunpack.c.l.b16 %v305
      %v338 = vunpack.c.l.b16 %v306
      %v339 = vunpack.c.l.b16 %v307
      %v340 = vunpack.c.l.b16 %v308
      %v341 = vunpack.c.l.b16 %v309
      %v342 = vpack.c.b16 %v327, %v326
      %v343 = vpack.c.b16 %v329, %v328
      %v344 = vpack.c.b16 %v331, %v330
      %v345 = vpack.c.b16 %v333, %v332
      %v346 = vpack.c.b16 %v335, %v334
      %v347 = vpack.c.b16 %v337, %v336
      %v348 = vpack.c.b16 %v339, %v338
      %v349 = vpack.c.b16 %v341, %v340
      %358 = vmatprep.subr.bf16.mxu0 0
      %359 = vmatpush1.bf16.msra.mxu0 %v349
      %360 = vmatprep.subr.bf16.mxu0 0
      %361 = vmatpush1.bf16.msra.mxu0 %v348
      %362 = vmatprep.subr.bf16.mxu0 0
      %363 = vmatpush1.bf16.msra.mxu0 %v347
      %364 = vmatprep.subr.bf16.mxu0 0
      %365 = vmatpush1.bf16.msra.mxu0 %v346
      %366 = vmatprep.subr.bf16.mxu0 0
      %367 = vmatpush1.bf16.msra.mxu0 %v345
      %368 = vmatprep.subr.bf16.mxu0 0
      %369 = vmatpush1.bf16.msra.mxu0 %v344
      %370 = vmatprep.subr.bf16.mxu0 0
      %371 = vmatpush1.bf16.msra.mxu0 %v343
      %372 = vmatprep.subr.bf16.mxu0 0
      %373 = vmatpush1.bf16.msra.mxu0 %v342
      %374 = vmatprep.subr.bf16.mxu0 0
      %375 = vmatpush2.bf16.msra.mxu0 0
      %376 = vmatprep.subr.bf16.mxu0 0
      %377 = vmatpush2.bf16.msra.mxu0 0
      %378 = vmatprep.subr.bf16.mxu0 0
      %379 = vmatpush2.bf16.msra.mxu0 0
      %380 = vmatprep.subr.bf16.mxu0 0
      %381 = vmatpush2.bf16.msra.mxu0 0
      %382 = vmatprep.subr.bf16.mxu0 0
      %383 = vmatpush2.bf16.msra.mxu0 0
      %384 = vmatprep.subr.bf16.mxu0 0
      %385 = vmatpush2.bf16.msra.mxu0 0
      %386 = vmatprep.subr.bf16.mxu0 0
      %387 = vmatpush2.bf16.msra.mxu0 0
      %388 = vmatprep.subr.bf16.mxu0 0
      %389 = vmatpush2.bf16.msra.mxu0 0
      %390 = vmatprep.mubr.bf16.mxu0 0
      %391 = vmatmul.mubr.bf16.gmra.mxu0 %v293
      %v392 = vpop.f32.mrf.mxu0
      %v393 = vadd.f32 0.0, %v392
      %v394 = vpop.f32.mrf.mxu0
      %v395 = vpop.f32.mrf.mxu0
      %v396 = vadd.f32 0.0, %v395
      %v397 = vpop.f32.mrf.mxu0
      %398 = vdwg.mxu0
      %v399 = vmul.f32 %v393, %v393
      %v400 = vmul.f32 %v396, %v396
      %401 = vadd.xlane.f32.xlu0 %v399
      %v402 = vpop.xlane.xlu0 %401
      %403 = vadd.xlane.f32.xlu0 %v400
      %v404 = vpop.xlane.xlu0 %403
      %v405 = vmax.f32 %v402, 1e-24
      %v406 = vmax.f32 %v404, 1e-24
      %v407 = vrsqrt.pop %v405
      %v408 = vrsqrt.pop %v406
      %v409 = vmul.f32 %v407, 3.1622777
      %v410 = vmul.f32 %v408, 3.1622777
      %v411 = vmul.f32 %v393, %v409
      %v412 = vmul.f32 %v396, %v410
      %413 = vmatprep.subr.mxu0 0.0
      %414 = vmatpush1.xpose.msra.mxu0 0.0
      %415 = vmatprep.subr.mxu0 0.0
      %416 = vmatpush1.xpose.msra.mxu0 0.0
      %417 = vmatprep.subr.mxu0 0.0
      %418 = vmatpush1.xpose.msra.mxu0 0.0
      %419 = vmatprep.subr.mxu0 0.0
      %420 = vmatpush1.xpose.msra.mxu0 0.0
      %421 = vmatprep.subr.mxu0 0.0
      %422 = vmatpush1.xpose.msra.mxu0 0.0
      %423 = vmatprep.subr.mxu0 0.0
      %424 = vmatpush1.xpose.msra.mxu0 0.0
      %425 = vmatprep.subr.mxu0 0.0
      %426 = vmatpush1.xpose.msra.mxu0 0.0
      %427 = vmatprep.subr.mxu0 0.0
      %428 = vmatpush1.xpose.msra.mxu0 0.0
      %429 = vmatprep.subr.mxu0 0.0
      %430 = vmatpush1.xpose.msra.mxu0 0.0
      %431 = vmatprep.subr.mxu0 0.0
      %432 = vmatpush1.xpose.msra.mxu0 0.0
      %433 = vmatprep.subr.mxu0 0.0
      %434 = vmatpush1.xpose.msra.mxu0 0.0
      %435 = vmatprep.subr.mxu0 0.0
      %436 = vmatpush1.xpose.msra.mxu0 0.0
      %437 = vmatprep.subr.mxu0 0.0
      %438 = vmatpush1.xpose.msra.mxu0 0.0
      %439 = vmatprep.subr.mxu0 0.0
      %440 = vmatpush1.xpose.msra.mxu0 0.0
      %441 = vmatprep.subr.mxu0 0.0
      %442 = vmatpush1.xpose.msra.mxu0 %v412
      %443 = vmatprep.subr.mxu0 0.0
      %444 = vmatpush1.xpose.msra.mxu0 %v411
      %445 = vmatprep.subr.mxu0 0.0
      %446 = vmatpush2.xpose.msra.mxu0 0.0
      %447 = vmatprep.subr.mxu0 0.0
      %448 = vmatpush2.xpose.msra.mxu0 0.0
      %449 = vmatprep.subr.mxu0 0.0
      %450 = vmatpush2.xpose.msra.mxu0 0.0
      %451 = vmatprep.subr.mxu0 0.0
      %452 = vmatpush2.xpose.msra.mxu0 0.0
      %453 = vmatprep.subr.mxu0 0.0
      %454 = vmatpush2.xpose.msra.mxu0 0.0
      %455 = vmatprep.subr.mxu0 0.0
      %456 = vmatpush2.xpose.msra.mxu0 0.0
      %457 = vmatprep.subr.mxu0 0.0
      %458 = vmatpush2.xpose.msra.mxu0 0.0
      %459 = vmatprep.subr.mxu0 0.0
      %460 = vmatpush2.xpose.msra.mxu0 0.0
      %461 = vmatprep.subr.mxu0 0.0
      %462 = vmatpush2.xpose.msra.mxu0 0.0
      %463 = vmatprep.subr.mxu0 0.0
      %464 = vmatpush2.xpose.msra.mxu0 0.0
      %465 = vmatprep.subr.mxu0 0.0
      %466 = vmatpush2.xpose.msra.mxu0 0.0
      %467 = vmatprep.subr.mxu0 0.0
      %468 = vmatpush2.xpose.msra.mxu0 0.0
      %469 = vmatprep.subr.mxu0 0.0
      %470 = vmatpush2.xpose.msra.mxu0 0.0
      %471 = vmatprep.subr.mxu0 0.0
      %472 = vmatpush2.xpose.msra.mxu0 0.0
      %473 = vmatprep.subr.mxu0 0.0
      %474 = vmatpush2.xpose.msra.mxu0 0.0
      %475 = vmatprep.subr.mxu0 0.0
      %476 = vmatpush2.xpose.msra.mxu0 0.0
      %477 = vmatprep.mubr.f32.mxu0 0.0
      %478 = vmatmul.mubr.f32.gmra.mxu0 %v411
      %v479 = vpop.f32.mrf.mxu0
      %v480 = vadd.f32 0.0, %v479
      %v481 = vpop.f32.mrf.mxu0
      %482 = vmatprep.mubr.f32.mxu0 0.0
      %483 = vmatmul.mubr.f32.gmra.mxu0 %v412
      %v484 = vpop.f32.mrf.mxu0
      %v485 = vadd.f32 0.0, %v484
      %v486 = vpop.f32.mrf.mxu0
      %487 = vdwg.mxu0
      %v488 = vlaneseq
      %v489 = vand.u32 %v488, 127
      %v490 = vlaneseq
      %v491 = vshrl.u32 %v490, 7
      %v492 = vadd.s32 %v491, 8
      %vm493 = vcmp.eq.s32.totalorder %v489, %v491
      %vm494 = vcmp.eq.s32.totalorder %v489, %v492
      %v495 = vadd.s32 %v492, 8
      %vm496 = vcmp.eq.s32.totalorder %v489, %v495
      %v497 = vsub.s32 %v491, 8
      %vm498 = vcmp.eq.s32.totalorder %v489, %v497
      %vm499 = vmor %vm494, %vm498
      %vm500 = vmor %vm496, %vm493
      %v501 = vsel %vm493, -1e+30, %v480
      %v502 = vsel %vm494, -1e+30, %v485
      %vm503 = vcmask 130048
      %v504 = vsel %vm503, %v501, -inf
      %505 = vmax.xlane.f32.xlu0 %v504
      %v506 = vpop.xlane.xlu0 %505
      %v507 = vsel %vm503, %v502, -inf
      %508 = vmax.xlane.f32.xlu0 %v507
      %v509 = vpop.xlane.xlu0 %508
      %v510 = vsub.f32 %v501, %v506
      %v511 = vsub.f32 %v502, %v509
      %v512 = vmul.f32 %v510, 1.442695
      %v513 = vpow.pop %v512
      %v514 = vmul.f32 %v511, 1.442695
      %v515 = vpow.pop %v514
      %v516 = vsel %vm503, %v513, 0.0
      %517 = vadd.xlane.f32.xlu0 %v516
      %v518 = vpop.xlane.xlu0 %517
      %v519 = vsel %vm503, %v515, 0.0
      %520 = vadd.xlane.f32.xlu0 %v519
      %v521 = vpop.xlane.xlu0 %520
      %v522 = vlog2.pop %v518
      %v523 = vmul.f32 %v522, 0.6931472
      %v524 = vlog2.pop %v521
      %v525 = vmul.f32 %v524, 0.6931472
      %v526 = vadd.f32 %v506, %v523
      %v527 = vadd.f32 %v509, %v525
      %v528 = vsel %vm499, %v480, 0.0
      %v529 = vsel %vm500, %v485, 0.0
      %v530 = vsel %vm503, %v528, 0.0
      %531 = vadd.xlane.f32.xlu0 %v530
      %v532 = vpop.xlane.xlu0 %531
      %v533 = vsel %vm503, %v529, 0.0
      %534 = vadd.xlane.f32.xlu0 %v533
      %v535 = vpop.xlane.xlu0 %534
      %v536 = vsub.f32 %v526, %v532
      %v537 = vsub.f32 %v527, %v535
      %vm538 = vcmask 7168
      %v539 = vsel %vm538, %v536, 0.0
      %v540 = vsel %vm538, %v537, 0.0
      %v541 = vadd.f32 %v539, %v540
      %542 = vadd.xlane.f32.xlu0 %v541
      %v543 = vpop.xlane.xlu0 %542
      %v544 = vrot.slane %v543, 4
      %v545 = vadd.f32 %v543, %v544
      %v546 = vrot.slane %v545, 2
      %v547 = vadd.f32 %v545, %v546
      %v548 = vrot.slane %v547, 1
      %v549 = vadd.f32 %v547, %v548
      %s550 = vtos %v549
      %s551 = sadd.f32 %s550, 0.0
      %s552 = smul.f32 %s551, 0.0625
      %s553 = scalar_lea.smem [#allocation3], 0
      %554 = sst [smem:[%s553]] %s552
    $region25: #{simclr_loss.1} parent=1 // pred_fallthru
      _
    // Predicated region
    $region26: #{simclr_loss.1} parent=1 // pred_check
      _
    $region27: #{simclr_loss.1} parent=1 // pred_check_branch
      %556 = sbr.rel (0) target = $region29
    $region28: #{simclr_loss.1} parent=1 // pred_region
      %s558 = ssub.s32 16, 16
      %559 = vsyncadd [#allocation4], %s558
      %562 = dma.smem_to_hbm [#allocation3], 16, %s4, [#allocation4]
    $region29: #{simclr_loss.1} parent=1 // pred_fallthru
      _
    // Predicated region
    $region30: #{simclr_loss.1} parent=1 // pred_check
      _
    $region31: #{simclr_loss.1} parent=1 // pred_check_branch
      %564 = sbr.rel (0) target = $region33
    $region32: #{simclr_loss.1} parent=1 // pred_region
      %565 = dma.done [#allocation4], 16
    $region33: #{simclr_loss.1} parent=1 // pred_fallthru
      _
    %566 = sfence
    %567 = vsyncpa [#allocation4], 1

</llo_original>
